<compile_context>
chip_gen: v6e
topology: v6e:2x2x1
jax: 0.10.0
libtpu: 0.0.40
codegen_flags: <defaults>
</compile_context>

<pallas_src>
import functools

import jax
import jax.numpy as jnp
from jax import lax
from jax.experimental import pallas as pl
from jax.experimental.pallas import tpu as pltpu


def _non_local_kernel(x_ref, wg_ref, wz_ref, shift_ref, o_ref, *, inv_hw):
    # x_ref     : (1, C, HW)  one batch element, channel-major (lane axis = HW)
    # wg_ref    : (Cb, C)     g 1x1-conv weight
    # wz_ref    : (C, Cb)     W_z 1x1-conv weight with BN scale folded into rows
    # shift_ref : (C, 1)      BN shift  (beta - running_mean * scale)
    # o_ref     : (1, C, HW)
    x = x_ref[0].astype(jnp.float32)                                  # (C, HW)

    # attention logits: S[i, j] = sum_c x[c, i] * x[c, j] / (H*W)
    s = lax.dot_general(x, x, (((0,), (0,)), ((), ())),
                        preferred_element_type=jnp.float32) * inv_hw  # (HW, HW)

    # numerically stable softmax over the last (lane) axis
    s_max = jnp.max(s, axis=-1, keepdims=True)
    p = jnp.exp(s - s_max)
    p = p / jnp.sum(p, axis=-1, keepdims=True)                        # (HW, HW)

    # g = Wg @ x  (1x1 conv), channel-major                            (Cb, HW)
    g = jnp.dot(wg_ref[...].astype(jnp.float32), x,
                preferred_element_type=jnp.float32)

    # y[cb, i] = sum_j p[i, j] * g[cb, j]  -> contract lane dim of both
    y = lax.dot_general(g, p, (((1,), (1,)), ((), ())),
                        preferred_element_type=jnp.float32)           # (Cb, HW)

    # W_z 1x1 conv (BN scale pre-folded) + BN shift + residual
    wy = jnp.dot(wz_ref[...].astype(jnp.float32), y,
                 preferred_element_type=jnp.float32)                  # (C, HW)
    z = wy + shift_ref[...] + x
    o_ref[0] = z.astype(o_ref.dtype)


def non_local_layer_forward(x, w_g, w_z, bn_gamma, bn_beta,
                            bn_mean, bn_var, eps=1e-5):
    """Forward pass equivalent to the PyTorch non_local_layer module
    (kernel_size=1, bias=False, BatchNorm in inference form).

    x        : (B, C, H, W)   float32
    w_g      : (Cb, C, 1, 1)  g-conv weight
    w_z      : (C, Cb, 1, 1)  W_z-conv weight
    bn_*     : (C,)           BatchNorm2d gamma / beta / running mean / var
    returns  : (B, C, H, W)
    """
    B, C, H, W = x.shape
    Cb = w_g.shape[0]
    assert w_g.shape == (Cb, C, 1, 1) and w_z.shape == (C, Cb, 1, 1), \
        "only kernel_size=1 (module default) is supported"
    HW = H * W

    # --- free reshapes only (no transpose / pad / extra HBM traffic) ---
    x_flat = x.reshape(B, C, HW)
    wg2 = w_g.reshape(Cb, C)
    wz2 = w_z.reshape(C, Cb)

    # fold BN (inference form) into W_z: bn(Wz @ y) = (scale*Wz) @ y + shift
    scale = bn_gamma / jnp.sqrt(bn_var + eps)                 # (C,)
    wz_scaled = wz2 * scale[:, None]
    shift = (bn_beta - bn_mean * scale).reshape(C, 1)

    kernel = functools.partial(_non_local_kernel, inv_hw=1.0 / float(HW))

    out = pl.pallas_call(
        kernel,
        out_shape=jax.ShapeDtypeStruct((B, C, HW), x.dtype),
        grid_spec=pltpu.PrefetchScalarGridSpec(
            num_scalar_prefetch=0,
            grid=(B,),
            in_specs=[
                pl.BlockSpec((1, C, HW), lambda b: (b, 0, 0)),
                pl.BlockSpec((Cb, C), lambda b: (0, 0)),
                pl.BlockSpec((C, Cb), lambda b: (0, 0)),
                pl.BlockSpec((C, 1), lambda b: (0, 0)),
            ],
            out_specs=pl.BlockSpec((1, C, HW), lambda b: (b, 0, 0)),
        ),
        compiler_params=pltpu.CompilerParams(
            dimension_semantics=("parallel",)),
    )(x_flat, wg2, wz_scaled, shift)

    return out.reshape(B, C, H, W)


def _reference(x, w_g, w_z, bn_gamma, bn_beta, bn_mean, bn_var, eps=1e-5):
    """Pure-JAX transcription of the PyTorch forward (BN in inference form)."""
    B, C, H, W = x.shape
    Cb = w_g.shape[0]
    HW = H * W
    xf = x.reshape(B, C, HW)
    theta = jnp.swapaxes(xf, 1, 2)                               # (B, HW, C)
    g = jnp.einsum('oc,bcn->bon', w_g.reshape(Cb, C), xf)        # (B, Cb, HW)
    g = jnp.swapaxes(g, 1, 2)                                    # (B, HW, Cb)
    attn = jnp.matmul(theta, jnp.swapaxes(theta, 1, 2)) / HW     # (B, HW, HW)
    attn = jax.nn.softmax(attn, axis=-1)
    y = jnp.matmul(attn, g)                                      # (B, HW, Cb)
    y = jnp.swapaxes(y, 1, 2).reshape(B, Cb, H, W)
    wy = jnp.einsum('oc,bchw->bohw', w_z.reshape(C, Cb), y)      # (B, C, H, W)
    inv_std = 1.0 / jnp.sqrt(bn_var + eps)
    wy = (wy - bn_mean[None, :, None, None]) \
        * (bn_gamma * inv_std)[None, :, None, None] \
        + bn_beta[None, :, None, None]
    return wy + x


if __name__ == "__main__":
    # Small deterministic example (module defaults are C=1024, Cb=512; scaled
    # down here): batch=2, input_channels=32, bottleneck_channels=16, 16x16.
    B, C, Cb, H, W = 2, 32, 16, 16, 16

    key = jax.random.PRNGKey(0)
    kx, kg, kz, kgam, kbet, kmu, kvar = jax.random.split(key, 7)
    x = jax.random.normal(kx, (B, C, H, W), dtype=jnp.float32)
    w_g = 0.1 * jax.random.normal(kg, (Cb, C, 1, 1), dtype=jnp.float32)
    w_z = 0.1 * jax.random.normal(kz, (C, Cb, 1, 1), dtype=jnp.float32)

    # non-default BN parameters so the whole attention + W_z path is exercised
    bn_gamma = jax.random.normal(kgam, (C,), dtype=jnp.float32)
    bn_beta = 0.1 * jax.random.normal(kbet, (C,), dtype=jnp.float32)
    bn_mean = 0.1 * jax.random.normal(kmu, (C,), dtype=jnp.float32)
    bn_var = jnp.abs(jax.random.normal(kvar, (C,), dtype=jnp.float32)) + 0.5

    out = non_local_layer_forward(x, w_g, w_z, bn_gamma, bn_beta,
                                  bn_mean, bn_var)
    out = jax.block_until_ready(out)

    ref = _reference(x, w_g, w_z, bn_gamma, bn_beta, bn_mean, bn_var)
    assert out.shape == (B, C, H, W)
    assert jnp.allclose(out, ref, atol=1e-4, rtol=1e-4), \
        float(jnp.max(jnp.abs(out - ref)))

    # Module's default init (BN weight=0, bias=0) => W_y == 0 => z == x.
    zeros = jnp.zeros((C,), jnp.float32)
    out_id = non_local_layer_forward(x, w_g, w_z, zeros, zeros, zeros,
                                     jnp.ones((C,), jnp.float32))
    out_id = jax.block_until_ready(out_id)
    assert jnp.allclose(out_id, x, atol=1e-5, rtol=1e-5)

    print("KERNEL_OK")
</pallas_src>

<mosaic_0001>
module attributes {stable_mosaic.version = 11 : i64} {
  func.func @_non_local_kernel(%arg0: i32, %arg1: memref<1x32x256xf32, #tpu.memory_space<vmem>>, %arg2: memref<16x32xf32, #tpu.memory_space<vmem>>, %arg3: memref<32x16xf32, #tpu.memory_space<vmem>>, %arg4: memref<32x1xf32, #tpu.memory_space<vmem>>, %arg5: memref<1x32x256xf32, #tpu.memory_space<vmem>>) attributes {dimension_semantics = [#tpu.dimension_semantics<parallel>], iteration_bounds = array<i64: 2>, scalar_prefetch = 0 : i64, scratch_operands = 0 : i64, tpu.core_type = #tpu.core_type<tc>, window_params = [{transform_indices = @transform_0, window_bounds = array<i64: 1, 32, 256>}, {pipeline_mode = #tpu.pipeline_mode<synchronous>, transform_indices = @transform_1, window_bounds = array<i64: 16, 32>}, {pipeline_mode = #tpu.pipeline_mode<synchronous>, transform_indices = @transform_2, window_bounds = array<i64: 32, 16>}, {pipeline_mode = #tpu.pipeline_mode<synchronous>, transform_indices = @transform_3, window_bounds = array<i64: 32, 1>}, {transform_indices = @transform_4, window_bounds = array<i64: 1, 32, 256>}]} {
    %c0 = arith.constant 0 : index
    %c0_0 = arith.constant 0 : index
    %c0_1 = arith.constant 0 : index
    %0 = vector.load %arg1[%c0, %c0_0, %c0_1] : memref<1x32x256xf32, #tpu.memory_space<vmem>>, vector<1x32x256xf32>
    %1 = vector.shape_cast %0 : vector<1x32x256xf32> to vector<32x256xf32>
    %cst = arith.constant dense<0.000000e+00> : vector<256x256xf32>
    %2 = tpu.matmul %1, %1, %cst {dimension_numbers = #tpu.dot_dimension_numbers<[0], [0], [1], [1], [0, 1, 1, 1], [], []>} : vector<32x256xf32>, vector<32x256xf32>, vector<256x256xf32> -> vector<256x256xf32>
    %cst_2 = arith.constant 3.906250e-03 : f32
    %3 = vector.broadcast %cst_2 : f32 to vector<256x256xf32>
    %4 = arith.mulf %2, %3 : vector<256x256xf32>
    %cst_3 = arith.constant dense<0xFF800000> : vector<256xf32>
    %5 = vector.multi_reduction <maximumf>, %4, %cst_3 [1] : vector<256x256xf32> to vector<256xf32>
    %6 = vector.shape_cast %5 : vector<256xf32> to vector<256x1xf32>
    %7 = vector.broadcast %6 : vector<256x1xf32> to vector<256x256xf32>
    %8 = arith.subf %4, %7 : vector<256x256xf32>
    %9 = math.exp %8 : vector<256x256xf32>
    %cst_4 = arith.constant dense<0.000000e+00> : vector<256xf32>
    %10 = vector.multi_reduction <add>, %9, %cst_4 [1] : vector<256x256xf32> to vector<256xf32>
    %11 = vector.shape_cast %10 : vector<256xf32> to vector<256x1xf32>
    %12 = vector.broadcast %11 : vector<256x1xf32> to vector<256x256xf32>
    %13 = arith.divf %9, %12 : vector<256x256xf32>
    %c0_5 = arith.constant 0 : index
    %c0_6 = arith.constant 0 : index
    %14 = vector.load %arg2[%c0_5, %c0_6] : memref<16x32xf32, #tpu.memory_space<vmem>>, vector<16x32xf32>
    %cst_7 = arith.constant dense<0.000000e+00> : vector<16x256xf32>
    %15 = tpu.matmul %14, %1, %cst_7 {dimension_numbers = #tpu.dot_dimension_numbers<[1], [0], [0], [1], [0, 0, 1, 1], [], []>} : vector<16x32xf32>, vector<32x256xf32>, vector<16x256xf32> -> vector<16x256xf32>
    %cst_8 = arith.constant dense<0.000000e+00> : vector<16x256xf32>
    %16 = tpu.matmul %15, %13, %cst_8 {dimension_numbers = #tpu.dot_dimension_numbers<[1], [1], [0], [0], [0, 0, 1, 0], [], []>} : vector<16x256xf32>, vector<256x256xf32>, vector<16x256xf32> -> vector<16x256xf32>
    %c0_9 = arith.constant 0 : index
    %c0_10 = arith.constant 0 : index
    %17 = vector.load %arg3[%c0_9, %c0_10] : memref<32x16xf32, #tpu.memory_space<vmem>>, vector<32x16xf32>
    %cst_11 = arith.constant dense<0.000000e+00> : vector<32x256xf32>
    %18 = tpu.matmul %17, %16, %cst_11 {dimension_numbers = #tpu.dot_dimension_numbers<[1], [0], [0], [1], [0, 0, 1, 1], [], []>} : vector<32x16xf32>, vector<16x256xf32>, vector<32x256xf32> -> vector<32x256xf32>
    %c0_12 = arith.constant 0 : index
    %c0_13 = arith.constant 0 : index
    %19 = vector.load %arg4[%c0_12, %c0_13] : memref<32x1xf32, #tpu.memory_space<vmem>>, vector<32x1xf32>
    %20 = vector.broadcast %19 : vector<32x1xf32> to vector<32x256xf32>
    %21 = arith.addf %18, %20 : vector<32x256xf32>
    %22 = arith.addf %21, %1 : vector<32x256xf32>
    %c0_14 = arith.constant 0 : index
    %c0_15 = arith.constant 0 : index
    %c0_16 = arith.constant 0 : index
    %23 = vector.load %arg5[%c0_14, %c0_15, %c0_16] : memref<1x32x256xf32, #tpu.memory_space<vmem>>, vector<1x32x256xf32>
    %24 = vector.shape_cast %23 : vector<1x32x256xf32> to vector<32x256xf32>
    %25 = vector.shape_cast %22 : vector<32x256xf32> to vector<1x32x256xf32>
    tpu.vector_store %arg5[%c0_14, %c0_15, %c0_16], %25 {strides = array<i32>} : memref<1x32x256xf32, #tpu.memory_space<vmem>>, vector<1x32x256xf32>,
    return
  }
  func.func @transform_0(%arg0: i32) -> (i32, i32, i32) {
    %c0_i32 = arith.constant 0 : i32
    %c0_i32_0 = arith.constant 0 : i32
    %c0_i32_1 = arith.constant 0 : i32
    return %arg0, %c0_i32, %c0_i32_0 : i32, i32, i32
  }
  func.func @transform_1(%arg0: i32) -> (i32, i32) {
    %c0_i32 = arith.constant 0 : i32
    %c0_i32_0 = arith.constant 0 : i32
    %c0_i32_1 = arith.constant 0 : i32
    return %c0_i32, %c0_i32_0 : i32, i32
  }
  func.func @transform_2(%arg0: i32) -> (i32, i32) {
    %c0_i32 = arith.constant 0 : i32
    %c0_i32_0 = arith.constant 0 : i32
    %c0_i32_1 = arith.constant 0 : i32
    return %c0_i32, %c0_i32_0 : i32, i32
  }
  func.func @transform_3(%arg0: i32) -> (i32, i32) {
    %c0_i32 = arith.constant 0 : i32
    %c0_i32_0 = arith.constant 0 : i32
    %c0_i32_1 = arith.constant 0 : i32
    return %c0_i32, %c0_i32_0 : i32, i32
  }
  func.func @transform_4(%arg0: i32) -> (i32, i32, i32) {
    %c0_i32 = arith.constant 0 : i32
    %c0_i32_0 = arith.constant 0 : i32
    %c0_i32_1 = arith.constant 0 : i32
    return %arg0, %c0_i32, %c0_i32_0 : i32, i32, i32
  }
}

</mosaic_0001>

<llo_original>
// kernel: tpu_custom_call.1
$region0: #{tpu_custom_call.1}
  #allocation0 [shape = 'u32[]', space=smem, size = 0x4, offset = 0x4, fixed_abs, tag = 'smem constant byte address 0x4 - core index']
  #allocation1 [shape = 'u32[144,128]{1,0:T(1,128)}', space=vmem, size = 0x12000, scoped, tag = 'internal scratch']
  %s0 = inlined_call_operand.hbm [shape: f32[2,32,256], index: 0, kind: input, shape index: {}]
  %s1 = inlined_call_operand.vmem [shape: f32[16,32], index: 1, kind: input, shape index: {}]
  %s2 = inlined_call_operand.vmem [shape: f32[32,16], index: 2, kind: input, shape index: {}]
  %s3 = inlined_call_operand.vmem [shape: f32[32,1], index: 3, kind: input, shape index: {}]
  %s4 = inlined_call_operand.hbm [shape: f32[2,32,256], index: 4, kind: output, shape index: {}]
  %s5 = sld [smem:[#allocation0]]
  $region53: #{tpu_custom_call.1} parent=0
    _
  %s7 = ssub.s32 1, %s5
  %s8 = scalar_select 0, %s7, %s5
  $region1: #{tpu_custom_call.1} parent=0
    #allocation2 [shape = 'u8[65536]{0}', space=vmem, size = 0x10000, scoped, tag = 'input window, operand 0']
    #allocation3 [shape = 's32[2]{0}', space=sflag, size = 0x8, scoped, tag = 'scoped memory for tpu_custom_call.1']
    #allocation4 [shape = 's32[2]{0}', space=sflag, size = 0x8, scoped, tag = 'scoped memory for tpu_custom_call.1']
    #allocation5 [shape = 'u8[65536]{0}', space=vmem, size = 0x10000, scoped, tag = 'output window, operand 0']
    %9 = vsyncpa [#allocation3], 0
    %s10 = scalar_lea.sflag [#allocation3], 1
    %11 = vsyncpa %s10, 0
    %12 = vsyncpa [#allocation4], 0
    %s13 = scalar_lea.sflag [#allocation4], 1
    %14 = vsyncpa %s13, 0
    loop: start=0, step=1, limit=4
    $region2: #{tpu_custom_call.1} parent=1 // loop_pre_header
      _
    $region3: #{tpu_custom_call.1} parent=1 // loop_header
      %s16 = sphi 0, %s20
      %p17 = scmp.ge.s32.totalorder %s16, 4
      %s26 = sphi 0, %s28
      %s29 = sphi 0, %s26
      %s30 = sphi 0, %s29
      %s46 = sphi 0, %s30
      %s50 = sphi 0, %s50
      %s52 = sphi 0, %s50
      %s53 = sphi 0, %s52
      %s67 = sphi 0, %s53
      %s71 = sphi 0, %s71
      %s73 = sphi 0, %s71
      %s74 = sphi 0, %s73
      %s88 = sphi 0, %s74
      %s92 = sphi 0, %s92
      %s94 = sphi 0, %s92
      %s95 = sphi 0, %s94
      %s109 = sphi 0, %s95
      %s115 = sphi 0, %s117
      %s118 = sphi 0, %s115
      %s119 = sphi 0, %s118
      %s135 = sphi 0, %s119
    $region4: #{tpu_custom_call.1} parent=1 // loop_header_branch
      %19 = sbr.rel (%p17) target = $region8
    $region5: #{tpu_custom_call.1} parent=1 // loop_body
      %s21 = ssub.s32 %s16, 1
      %s22 = ssub.s32 %s16, 2
      %s23 = sadd.s32 %s16, 1
      %s24 = ssub.s32 %s16, %s23
      %p25 = scmp.eq.s32.totalorder %s24, 0
      %s27 = sadd.s32 %s26, 1
      %s28 = scalar_select %p25, %s26, %s27
      %p31 = pneg %p25
      %p32 = scmp.eq.s32.totalorder %s16, 1
      %p33 = por %p31, %p32
      %p34 = scmp.ne.s32.totalorder %s26, %s29
      %p35 = scmp.eq.s32.totalorder %s16, 0
      %p36 = por %p34, %p35
      %p37 = scmp.ne.s32.totalorder %s26, %s29
      %p38 = scmp.eq.s32.totalorder %s21, 1
      %p39 = por %p37, %p38
      %p40 = scmp.ne.s32.totalorder %s29, %s30
      %p41 = scmp.eq.s32.totalorder %s21, 0
      %p42 = por %p40, %p41
      %p43 = scmp.ne.s32.totalorder %s29, %s30
      %p44 = scmp.eq.s32.totalorder %s22, 1
      %p45 = por %p43, %p44
      %p47 = scmp.ne.s32.totalorder %s30, %s46
      %p48 = scmp.eq.s32.totalorder %s22, 0
      %p49 = por %p47, %p48
      %s51 = sadd.s32 %s50, 1
      %p54 = scmp.eq.s32.totalorder %s16, 1
      %p55 = scmp.ne.s32.totalorder %s50, %s52
      %p56 = scmp.eq.s32.totalorder %s16, 0
      %p57 = por %p55, %p56
      %p58 = scmp.ne.s32.totalorder %s50, %s52
      %p59 = scmp.eq.s32.totalorder %s21, 1
      %p60 = por %p58, %p59
      %p61 = scmp.ne.s32.totalorder %s52, %s53
      %p62 = scmp.eq.s32.totalorder %s21, 0
      %p63 = por %p61, %p62
      %p64 = scmp.ne.s32.totalorder %s52, %s53
      %p65 = scmp.eq.s32.totalorder %s22, 1
      %p66 = por %p64, %p65
      %p68 = scmp.ne.s32.totalorder %s53, %s67
      %p69 = scmp.eq.s32.totalorder %s22, 0
      %p70 = por %p68, %p69
      %s72 = sadd.s32 %s71, 1
      %p75 = scmp.eq.s32.totalorder %s16, 1
      %p76 = scmp.ne.s32.totalorder %s71, %s73
      %p77 = scmp.eq.s32.totalorder %s16, 0
      %p78 = por %p76, %p77
      %p79 = scmp.ne.s32.totalorder %s71, %s73
      %p80 = scmp.eq.s32.totalorder %s21, 1
      %p81 = por %p79, %p80
      %p82 = scmp.ne.s32.totalorder %s73, %s74
      %p83 = scmp.eq.s32.totalorder %s21, 0
      %p84 = por %p82, %p83
      %p85 = scmp.ne.s32.totalorder %s73, %s74
      %p86 = scmp.eq.s32.totalorder %s22, 1
      %p87 = por %p85, %p86
      %p89 = scmp.ne.s32.totalorder %s74, %s88
      %p90 = scmp.eq.s32.totalorder %s22, 0
      %p91 = por %p89, %p90
      %s93 = sadd.s32 %s92, 1
      %p96 = scmp.eq.s32.totalorder %s16, 1
      %p97 = scmp.ne.s32.totalorder %s92, %s94
      %p98 = scmp.eq.s32.totalorder %s16, 0
      %p99 = por %p97, %p98
      %p100 = scmp.ne.s32.totalorder %s92, %s94
      %p101 = scmp.eq.s32.totalorder %s21, 1
      %p102 = por %p100, %p101
      %p103 = scmp.ne.s32.totalorder %s94, %s95
      %p104 = scmp.eq.s32.totalorder %s21, 0
      %p105 = por %p103, %p104
      %p106 = scmp.ne.s32.totalorder %s94, %s95
      %p107 = scmp.eq.s32.totalorder %s22, 1
      %p108 = por %p106, %p107
      %p110 = scmp.ne.s32.totalorder %s95, %s109
      %p111 = scmp.eq.s32.totalorder %s22, 0
      %p112 = por %p110, %p111
      %s113 = ssub.s32 %s16, %s23
      %p114 = scmp.eq.s32.totalorder %s113, 0
      %s116 = sadd.s32 %s115, 1
      %s117 = scalar_select %p114, %s115, %s116
      %p120 = pneg %p114
      %p121 = scmp.eq.s32.totalorder %s16, 1
      %p122 = por %p120, %p121
      %p123 = scmp.ne.s32.totalorder %s115, %s118
      %p124 = scmp.eq.s32.totalorder %s16, 0
      %p125 = por %p123, %p124
      %p126 = scmp.ne.s32.totalorder %s115, %s118
      %p127 = scmp.eq.s32.totalorder %s21, 1
      %p128 = por %p126, %p127
      %p129 = scmp.ne.s32.totalorder %s118, %s119
      %p130 = scmp.eq.s32.totalorder %s21, 0
      %p131 = por %p129, %p130
      %p132 = scmp.ne.s32.totalorder %s118, %s119
      %p133 = scmp.eq.s32.totalorder %s22, 1
      %p134 = por %p132, %p133
      %p136 = scmp.ne.s32.totalorder %s119, %s135
      %p137 = scmp.eq.s32.totalorder %s22, 0
      %p138 = por %p136, %p137
      %p139 = scmp.le.s32.totalorder 1, %s16
      %p140 = scmp.lt.s32.totalorder %s16, 3
      %p141 = pnand %p139, %p140
      %p142 = pneg %p141
      // Predicated region
      $region9: #{tpu_custom_call.1} parent=5 // pred_check
        _
      $region10: #{tpu_custom_call.1} parent=5 // pred_check_branch
        %144 = sbr.rel (%p141) target = $region12
      $region11: #{tpu_custom_call.1} parent=5 // pred_region
        %s145 = ssub.s32 %s16, 1
        // Predicated region
        $region13: #{tpu_custom_call.1} parent=11 // pred_check
          %p146 = pneg %p63
        $region14: #{tpu_custom_call.1} parent=11 // pred_check_branch
          %148 = sbr.rel (%p146) target = $region16
        $region15: #{tpu_custom_call.1} parent=11 // pred_region
          _
        $region16: #{tpu_custom_call.1} parent=11 // pred_fallthru
          _
        // Predicated region
        $region17: #{tpu_custom_call.1} parent=11 // pred_check
          %p149 = pneg %p84
        $region18: #{tpu_custom_call.1} parent=11 // pred_check_branch
          %151 = sbr.rel (%p149) target = $region20
        $region19: #{tpu_custom_call.1} parent=11 // pred_region
          _
        $region20: #{tpu_custom_call.1} parent=11 // pred_fallthru
          _
        // Predicated region
        $region21: #{tpu_custom_call.1} parent=11 // pred_check
          %p152 = pneg %p105
        $region22: #{tpu_custom_call.1} parent=11 // pred_check_branch
          %154 = sbr.rel (%p152) target = $region24
        $region23: #{tpu_custom_call.1} parent=11 // pred_region
          _
        $region24: #{tpu_custom_call.1} parent=11 // pred_fallthru
          _
      $region12: #{tpu_custom_call.1} parent=5 // pred_fallthru
        _
      %p155 = scmp.lt.s32.totalorder %s16, 2
      // Predicated region
      $region25: #{tpu_custom_call.1} parent=5 // pred_check
        %p156 = pneg %p155
      $region26: #{tpu_custom_call.1} parent=5 // pred_check_branch
        %158 = sbr.rel (%p156) target = $region28
      $region27: #{tpu_custom_call.1} parent=5 // pred_region
        // Predicated region
        $region29: #{tpu_custom_call.1} parent=27 // pred_check
          %p159 = pneg %p36
        $region30: #{tpu_custom_call.1} parent=27 // pred_check_branch
          %161 = sbr.rel (%p159) target = $region32
        $region31: #{tpu_custom_call.1} parent=27 // pred_region
          %s162 = sand.u32 %s26, 1
          %s163 = scalar_lea.sflag [#allocation3], %s162
          %s164 = sand.u32 %s26, 1
          %s165 = smul.addr %s164, 64
          %s166 = scalar_lea.vmem [#allocation2], %s165
          %s168 = ssub.s32 1024, 1024
          %169 = vsyncadd %s163, %s168
          %s170 = smul.addr %s16, 8
          %s171 = smul.addr %s170, 128
          %s172 = scalar_lea.hbm %s0, %s171
          %s173 = sshll.u32 %s166, 4
          %s174 = int_to_ptr.vmem [resolvable:$true] %s173
          %179 = dma.hbm_to_vmem [thread:$0]  %s172, 1024, %s174, %s163, 256, 256, 16
        $region32: #{tpu_custom_call.1} parent=27 // pred_fallthru
          _
      $region28: #{tpu_custom_call.1} parent=5 // pred_fallthru
        _
      %p180 = scmp.le.s32.totalorder 1, %s16
      %p181 = scmp.lt.s32.totalorder %s16, 3
      %p182 = pnand %p180, %p181
      %p183 = pneg %p182
      // Predicated region
      $region33: #{tpu_custom_call.1} parent=5 // pred_check
        _
      $region34: #{tpu_custom_call.1} parent=5 // pred_check_branch
        %185 = sbr.rel (%p182) target = $region36
      $region35: #{tpu_custom_call.1} parent=5 // pred_region
        %s186 = ssub.s32 %s16, 1
        %s187 = sand.u32 %s29, 1
        %s188 = scalar_lea.sflag [#allocation3], %s187
        %s189 = sand.u32 %s29, 1
        %s190 = smul.addr %s189, 64
        %s191 = scalar_lea.vmem [#allocation2], %s190
        // Predicated region
        $region37: #{tpu_custom_call.1} parent=35 // pred_check
          %p192 = pneg %p42
        $region38: #{tpu_custom_call.1} parent=35 // pred_check_branch
          %194 = sbr.rel (%p192) target = $region40
        $region39: #{tpu_custom_call.1} parent=35 // pred_region
          %195 = dma.done %s188, 1024
        $region40: #{tpu_custom_call.1} parent=35 // pred_fallthru
          _
        %s196 = sand.u32 %s29, 1
        %s197 = scalar_lea.sflag [#allocation3], %s196
        %s198 = sand.u32 %s29, 1
        %s199 = smul.addr %s198, 64
        %s200 = scalar_lea.vmem [#allocation2], %s199
        %p201 = pneg %p42
        %p202 = pneg %p39
        %p203 = pneg %p63
        %p204 = pneg %p60
        %p205 = pneg %p84
        %p206 = pneg %p81
        %p207 = pneg %p105
        %p208 = pneg %p102
        %p209 = pneg %p131
        %p210 = pneg %p128
        %s211 = sand.u32 %s118, 1
        %s212 = scalar_lea.sflag [#allocation4], %s211
        %s213 = sand.u32 %s118, 1
        %s214 = smul.addr %s213, 64
        %s215 = scalar_lea.vmem [#allocation5], %s214
        %v216 = vld [vmem:[%s191] sm:$0xff]
        %v217 = vld [vmem:[%s191 + $0x8] sm:$0xff]
        %v218 = vld [vmem:[%s191 + $0x10] sm:$0xff]
        %v219 = vld [vmem:[%s191 + $0x18] sm:$0xff]
        %v220 = vld [vmem:[%s191 + $0x20] sm:$0xff]
        %v221 = vld [vmem:[%s191 + $0x28] sm:$0xff]
        %v222 = vld [vmem:[%s191 + $0x30] sm:$0xff]
        %v223 = vld [vmem:[%s191 + $0x38] sm:$0xff]
        %224 = vxpose.xlu0.b32.start [1/16] %v216, 128
        %225 = vxpose.xlu0.b32.cont [2/16] %v218, 128
        %226 = vxpose.xlu0.b32.cont [3/16] %v220, 128
        %227 = vxpose.xlu0.b32.cont [4/16] %v222, 128
        %228 = vxpose.xlu0.b32.cont [5/16] 0.0, 128
        %229 = vxpose.xlu0.b32.cont [6/16] 0.0, 128
        %230 = vxpose.xlu0.b32.cont [7/16] 0.0, 128
        %231 = vxpose.xlu0.b32.cont [8/16] 0.0, 128
        %232 = vxpose.xlu0.b32.cont [9/16] 0.0, 128
        %233 = vxpose.xlu0.b32.cont [10/16] 0.0, 128
        %234 = vxpose.xlu0.b32.cont [11/16] 0.0, 128
        %235 = vxpose.xlu0.b32.cont [12/16] 0.0, 128
        %236 = vxpose.xlu0.b32.cont [13/16] 0.0, 128
        %237 = vxpose.xlu0.b32.cont [14/16] 0.0, 128
        %238 = vxpose.xlu0.b32.cont [15/16] 0.0, 128
        %239 = vxpose.xlu0.b32.end [16/16] 0.0, 128
        %v240 = vpop.trf.xlu0
        %v241 = vpop.trf.xlu0
        %v242 = vpop.trf.xlu0
        %v243 = vpop.trf.xlu0
        %v244 = vpop.trf.xlu0
        %v245 = vpop.trf.xlu0
        %v246 = vpop.trf.xlu0
        %v247 = vpop.trf.xlu0
        %v248 = vpop.trf.xlu0
        %v249 = vpop.trf.xlu0
        %v250 = vpop.trf.xlu0
        %v251 = vpop.trf.xlu0
        %v252 = vpop.trf.xlu0
        %v253 = vpop.trf.xlu0
        %v254 = vpop.trf.xlu0
        %v255 = vpop.trf.xlu0
        %256 = vxpose.xlu0.b32.start [1/16] %v217, 128
        %257 = vxpose.xlu0.b32.cont [2/16] %v219, 128
        %258 = vxpose.xlu0.b32.cont [3/16] %v221, 128
        %259 = vxpose.xlu0.b32.cont [4/16] %v223, 128
        %260 = vxpose.xlu0.b32.cont [5/16] 0.0, 128
        %261 = vxpose.xlu0.b32.cont [6/16] 0.0, 128
        %262 = vxpose.xlu0.b32.cont [7/16] 0.0, 128
        %263 = vxpose.xlu0.b32.cont [8/16] 0.0, 128
        %264 = vxpose.xlu0.b32.cont [9/16] 0.0, 128
        %265 = vxpose.xlu0.b32.cont [10/16] 0.0, 128
        %266 = vxpose.xlu0.b32.cont [11/16] 0.0, 128
        %267 = vxpose.xlu0.b32.cont [12/16] 0.0, 128
        %268 = vxpose.xlu0.b32.cont [13/16] 0.0, 128
        %269 = vxpose.xlu0.b32.cont [14/16] 0.0, 128
        %270 = vxpose.xlu0.b32.cont [15/16] 0.0, 128
        %271 = vxpose.xlu0.b32.end [16/16] 0.0, 128
        %v272 = vpop.trf.xlu0
        %v273 = vpop.trf.xlu0
        %v274 = vpop.trf.xlu0
        %v275 = vpop.trf.xlu0
        %v276 = vpop.trf.xlu0
        %v277 = vpop.trf.xlu0
        %v278 = vpop.trf.xlu0
        %v279 = vpop.trf.xlu0
        %v280 = vpop.trf.xlu0
        %v281 = vpop.trf.xlu0
        %v282 = vpop.trf.xlu0
        %v283 = vpop.trf.xlu0
        %v284 = vpop.trf.xlu0
        %v285 = vpop.trf.xlu0
        %v286 = vpop.trf.xlu0
        %v287 = vpop.trf.xlu0
        %vm288 = vcmask 261120
        %v290 = vsel %vm288, %v240, 0
        %v293 = vsel %vm288, %v241, 0
        %v296 = vsel %vm288, %v242, 0
        %v299 = vsel %vm288, %v243, 0
        %v302 = vsel %vm288, %v244, 0
        %v305 = vsel %vm288, %v245, 0
        %v308 = vsel %vm288, %v246, 0
        %v311 = vsel %vm288, %v247, 0
        %v314 = vsel %vm288, %v248, 0
        %v317 = vsel %vm288, %v249, 0
        %v320 = vsel %vm288, %v250, 0
        %v323 = vsel %vm288, %v251, 0
        %v326 = vsel %vm288, %v252, 0
        %v329 = vsel %vm288, %v253, 0
        %v332 = vsel %vm288, %v254, 0
        %v335 = vsel %vm288, %v255, 0
        %v338 = vsel %vm288, %v272, 0
        %v341 = vsel %vm288, %v273, 0
        %v344 = vsel %vm288, %v274, 0
        %v347 = vsel %vm288, %v275, 0
        %v350 = vsel %vm288, %v276, 0
        %v353 = vsel %vm288, %v277, 0
        %v356 = vsel %vm288, %v278, 0
        %v359 = vsel %vm288, %v279, 0
        %v362 = vsel %vm288, %v280, 0
        %v365 = vsel %vm288, %v281, 0
        %v368 = vsel %vm288, %v282, 0
        %v371 = vsel %vm288, %v283, 0
        %v374 = vsel %vm288, %v284, 0
        %v377 = vsel %vm288, %v285, 0
        %v380 = vsel %vm288, %v286, 0
        %v383 = vsel %vm288, %v287, 0
        %385 = vmatprep.subr.mxu0 0.0
        %386 = vmatpush1.msra.mxu0 0.0
        %387 = vmatprep.subr.mxu0 0.0
        %388 = vmatpush1.msra.mxu0 0.0
        %389 = vmatprep.subr.mxu0 0.0
        %390 = vmatpush1.msra.mxu0 0.0
        %391 = vmatprep.subr.mxu0 0.0
        %392 = vmatpush1.msra.mxu0 0.0
        %393 = vmatprep.subr.mxu0 0.0
        %394 = vmatpush1.msra.mxu0 0.0
        %395 = vmatprep.subr.mxu0 0.0
        %396 = vmatpush1.msra.mxu0 0.0
        %397 = vmatprep.subr.mxu0 0.0
        %398 = vmatpush1.msra.mxu0 0.0
        %399 = vmatprep.subr.mxu0 0.0
        %400 = vmatpush1.msra.mxu0 0.0
        %401 = vmatprep.subr.mxu0 0.0
        %402 = vmatpush1.msra.mxu0 0.0
        %403 = vmatprep.subr.mxu0 0.0
        %404 = vmatpush1.msra.mxu0 0.0
        %405 = vmatprep.subr.mxu0 0.0
        %406 = vmatpush1.msra.mxu0 0.0
        %407 = vmatprep.subr.mxu0 0.0
        %408 = vmatpush1.msra.mxu0 0.0
        %409 = vmatprep.subr.mxu0 %v223
        %410 = vmatpush1.msra.mxu0 %v222
        %411 = vmatprep.subr.mxu0 %v221
        %412 = vmatpush1.msra.mxu0 %v220
        %413 = vmatprep.subr.mxu0 %v219
        %414 = vmatpush1.msra.mxu0 %v218
        %415 = vmatprep.subr.mxu0 %v217
        %416 = vmatpush1.msra.mxu0 %v216
        %417 = vmatprep.subr.mxu0 0.0
        %418 = vmatpush2.msra.mxu0 0.0
        %419 = vmatprep.subr.mxu0 0.0
        %420 = vmatpush2.msra.mxu0 0.0
        %421 = vmatprep.subr.mxu0 0.0
        %422 = vmatpush2.msra.mxu0 0.0
        %423 = vmatprep.subr.mxu0 0.0
        %424 = vmatpush2.msra.mxu0 0.0
        %425 = vmatprep.subr.mxu0 0.0
        %426 = vmatpush2.msra.mxu0 0.0
        %427 = vmatprep.subr.mxu0 0.0
        %428 = vmatpush2.msra.mxu0 0.0
        %429 = vmatprep.subr.mxu0 0.0
        %430 = vmatpush2.msra.mxu0 0.0
        %431 = vmatprep.subr.mxu0 0.0
        %432 = vmatpush2.msra.mxu0 0.0
        %433 = vmatprep.subr.mxu0 0.0
        %434 = vmatpush2.msra.mxu0 0.0
        %435 = vmatprep.subr.mxu0 0.0
        %436 = vmatpush2.msra.mxu0 0.0
        %437 = vmatprep.subr.mxu0 0.0
        %438 = vmatpush2.msra.mxu0 0.0
        %439 = vmatprep.subr.mxu0 0.0
        %440 = vmatpush2.msra.mxu0 0.0
        %441 = vmatprep.subr.mxu0 0.0
        %442 = vmatpush2.msra.mxu0 0.0
        %443 = vmatprep.subr.mxu0 0.0
        %444 = vmatpush2.msra.mxu0 0.0
        %445 = vmatprep.subr.mxu0 0.0
        %446 = vmatpush2.msra.mxu0 0.0
        %447 = vmatprep.subr.mxu0 0.0
        %448 = vmatpush2.msra.mxu0 0.0
        %449 = vmatprep.mubr.f32.mxu0 0.0
        %450 = vmatmul.mubr.f32.gmra.mxu0 %v290
        %v451 = vpop.f32.mrf.mxu0
        %v452 = vadd.f32 0.0, %v451
        %v453 = vpop.f32.mrf.mxu0
        %v454 = vadd.f32 0.0, %v453
        %455 = vmatprep.mubr.f32.mxu0 0.0
        %456 = vmatmul.mubr.f32.gmra.mxu0 %v293
        %v457 = vpop.f32.mrf.mxu0
        %v458 = vadd.f32 0.0, %v457
        %v459 = vpop.f32.mrf.mxu0
        %v460 = vadd.f32 0.0, %v459
        %461 = vmatprep.mubr.f32.mxu0 0.0
        %462 = vmatmul.mubr.f32.gmra.mxu0 %v296
        %v463 = vpop.f32.mrf.mxu0
        %v464 = vadd.f32 0.0, %v463
        %v465 = vpop.f32.mrf.mxu0
        %v466 = vadd.f32 0.0, %v465
        %467 = vmatprep.mubr.f32.mxu0 0.0
        %468 = vmatmul.mubr.f32.gmra.mxu0 %v299
        %v469 = vpop.f32.mrf.mxu0
        %v470 = vadd.f32 0.0, %v469
        %v471 = vpop.f32.mrf.mxu0
        %v472 = vadd.f32 0.0, %v471
        %473 = vmatprep.mubr.f32.mxu0 0.0
        %474 = vmatmul.mubr.f32.gmra.mxu0 %v302
        %v475 = vpop.f32.mrf.mxu0
        %v476 = vadd.f32 0.0, %v475
        %v477 = vpop.f32.mrf.mxu0
        %v478 = vadd.f32 0.0, %v477
        %479 = vmatprep.mubr.f32.mxu0 0.0
        %480 = vmatmul.mubr.f32.gmra.mxu0 %v305
        %v481 = vpop.f32.mrf.mxu0
        %v482 = vadd.f32 0.0, %v481
        %v483 = vpop.f32.mrf.mxu0
        %v484 = vadd.f32 0.0, %v483
        %485 = vmatprep.mubr.f32.mxu0 0.0
        %486 = vmatmul.mubr.f32.gmra.mxu0 %v308
        %v487 = vpop.f32.mrf.mxu0
        %v488 = vadd.f32 0.0, %v487
        %v489 = vpop.f32.mrf.mxu0
        %v490 = vadd.f32 0.0, %v489
        %491 = vmatprep.mubr.f32.mxu0 0.0
        %492 = vmatmul.mubr.f32.gmra.mxu0 %v311
        %v493 = vpop.f32.mrf.mxu0
        %v494 = vadd.f32 0.0, %v493
        %v495 = vpop.f32.mrf.mxu0
        %v496 = vadd.f32 0.0, %v495
        %497 = vmatprep.mubr.f32.mxu0 0.0
        %498 = vmatmul.mubr.f32.gmra.mxu0 %v314
        %v499 = vpop.f32.mrf.mxu0
        %v500 = vadd.f32 0.0, %v499
        %v501 = vpop.f32.mrf.mxu0
        %v502 = vadd.f32 0.0, %v501
        %503 = vmatprep.mubr.f32.mxu0 0.0
        %504 = vmatmul.mubr.f32.gmra.mxu0 %v317
        %v505 = vpop.f32.mrf.mxu0
        %v506 = vadd.f32 0.0, %v505
        %v507 = vpop.f32.mrf.mxu0
        %v508 = vadd.f32 0.0, %v507
        %509 = vmatprep.mubr.f32.mxu0 0.0
        %510 = vmatmul.mubr.f32.gmra.mxu0 %v320
        %v511 = vpop.f32.mrf.mxu0
        %v512 = vadd.f32 0.0, %v511
        %v513 = vpop.f32.mrf.mxu0
        %v514 = vadd.f32 0.0, %v513
        %515 = vmatprep.mubr.f32.mxu0 0.0
        %516 = vmatmul.mubr.f32.gmra.mxu0 %v323
        %v517 = vpop.f32.mrf.mxu0
        %v518 = vadd.f32 0.0, %v517
        %v519 = vpop.f32.mrf.mxu0
        %v520 = vadd.f32 0.0, %v519
        %521 = vmatprep.mubr.f32.mxu0 0.0
        %522 = vmatmul.mubr.f32.gmra.mxu0 %v326
        %v523 = vpop.f32.mrf.mxu0
        %v524 = vadd.f32 0.0, %v523
        %v525 = vpop.f32.mrf.mxu0
        %v526 = vadd.f32 0.0, %v525
        %527 = vmatprep.mubr.f32.mxu0 0.0
        %528 = vmatmul.mubr.f32.gmra.mxu0 %v329
        %v529 = vpop.f32.mrf.mxu0
        %v530 = vadd.f32 0.0, %v529
        %v531 = vpop.f32.mrf.mxu0
        %v532 = vadd.f32 0.0, %v531
        %533 = vmatprep.mubr.f32.mxu0 0.0
        %534 = vmatmul.mubr.f32.gmra.mxu0 %v332
        %v535 = vpop.f32.mrf.mxu0
        %v536 = vadd.f32 0.0, %v535
        %v537 = vpop.f32.mrf.mxu0
        %v538 = vadd.f32 0.0, %v537
        %539 = vmatprep.mubr.f32.mxu0 0.0
        %540 = vmatmul.mubr.f32.gmra.mxu0 %v335
        %v541 = vpop.f32.mrf.mxu0
        %v542 = vadd.f32 0.0, %v541
        %v543 = vpop.f32.mrf.mxu0
        %v544 = vadd.f32 0.0, %v543
        %545 = vmatprep.mubr.f32.mxu0 0.0
        %546 = vmatmul.mubr.f32.gmra.mxu0 %v338
        %v547 = vpop.f32.mrf.mxu0
        %v548 = vadd.f32 0.0, %v547
        %v549 = vpop.f32.mrf.mxu0
        %v550 = vadd.f32 0.0, %v549
        %551 = vmatprep.mubr.f32.mxu0 0.0
        %552 = vmatmul.mubr.f32.gmra.mxu0 %v341
        %v553 = vpop.f32.mrf.mxu0
        %v554 = vadd.f32 0.0, %v553
        %v555 = vpop.f32.mrf.mxu0
        %v556 = vadd.f32 0.0, %v555
        %557 = vmatprep.mubr.f32.mxu0 0.0
        %558 = vmatmul.mubr.f32.gmra.mxu0 %v344
        %v559 = vpop.f32.mrf.mxu0
        %v560 = vadd.f32 0.0, %v559
        %v561 = vpop.f32.mrf.mxu0
        %v562 = vadd.f32 0.0, %v561
        %563 = vmatprep.mubr.f32.mxu0 0.0
        %564 = vmatmul.mubr.f32.gmra.mxu0 %v347
        %v565 = vpop.f32.mrf.mxu0
        %v566 = vadd.f32 0.0, %v565
        %v567 = vpop.f32.mrf.mxu0
        %v568 = vadd.f32 0.0, %v567
        %569 = vmatprep.mubr.f32.mxu0 0.0
        %570 = vmatmul.mubr.f32.gmra.mxu0 %v350
        %v571 = vpop.f32.mrf.mxu0
        %v572 = vadd.f32 0.0, %v571
        %v573 = vpop.f32.mrf.mxu0
        %v574 = vadd.f32 0.0, %v573
        %575 = vmatprep.mubr.f32.mxu0 0.0
        %576 = vmatmul.mubr.f32.gmra.mxu0 %v353
        %v577 = vpop.f32.mrf.mxu0
        %v578 = vadd.f32 0.0, %v577
        %v579 = vpop.f32.mrf.mxu0
        %v580 = vadd.f32 0.0, %v579
        %581 = vmatprep.mubr.f32.mxu0 0.0
        %582 = vmatmul.mubr.f32.gmra.mxu0 %v356
        %v583 = vpop.f32.mrf.mxu0
        %v584 = vadd.f32 0.0, %v583
        %v585 = vpop.f32.mrf.mxu0
        %v586 = vadd.f32 0.0, %v585
        %587 = vmatprep.mubr.f32.mxu0 0.0
        %588 = vmatmul.mubr.f32.gmra.mxu0 %v359
        %v589 = vpop.f32.mrf.mxu0
        %v590 = vadd.f32 0.0, %v589
        %v591 = vpop.f32.mrf.mxu0
        %v592 = vadd.f32 0.0, %v591
        %593 = vmatprep.mubr.f32.mxu0 0.0
        %594 = vmatmul.mubr.f32.gmra.mxu0 %v362
        %v595 = vpop.f32.mrf.mxu0
        %v596 = vadd.f32 0.0, %v595
        %v597 = vpop.f32.mrf.mxu0
        %v598 = vadd.f32 0.0, %v597
        %599 = vmatprep.mubr.f32.mxu0 0.0
        %600 = vmatmul.mubr.f32.gmra.mxu0 %v365
        %v601 = vpop.f32.mrf.mxu0
        %v602 = vadd.f32 0.0, %v601
        %v603 = vpop.f32.mrf.mxu0
        %v604 = vadd.f32 0.0, %v603
        %605 = vmatprep.mubr.f32.mxu0 0.0
        %606 = vmatmul.mubr.f32.gmra.mxu0 %v368
        %v607 = vpop.f32.mrf.mxu0
        %v608 = vadd.f32 0.0, %v607
        %v609 = vpop.f32.mrf.mxu0
        %v610 = vadd.f32 0.0, %v609
        %611 = vmatprep.mubr.f32.mxu0 0.0
        %612 = vmatmul.mubr.f32.gmra.mxu0 %v371
        %v613 = vpop.f32.mrf.mxu0
        %v614 = vadd.f32 0.0, %v613
        %v615 = vpop.f32.mrf.mxu0
        %v616 = vadd.f32 0.0, %v615
        %617 = vmatprep.mubr.f32.mxu0 0.0
        %618 = vmatmul.mubr.f32.gmra.mxu0 %v374
        %v619 = vpop.f32.mrf.mxu0
        %v620 = vadd.f32 0.0, %v619
        %v621 = vpop.f32.mrf.mxu0
        %v622 = vadd.f32 0.0, %v621
        %623 = vmatprep.mubr.f32.mxu0 0.0
        %624 = vmatmul.mubr.f32.gmra.mxu0 %v377
        %v625 = vpop.f32.mrf.mxu0
        %v626 = vadd.f32 0.0, %v625
        %v627 = vpop.f32.mrf.mxu0
        %v628 = vadd.f32 0.0, %v627
        %629 = vmatprep.mubr.f32.mxu0 0.0
        %630 = vmatmul.mubr.f32.gmra.mxu0 %v380
        %v631 = vpop.f32.mrf.mxu0
        %v632 = vadd.f32 0.0, %v631
        %v633 = vpop.f32.mrf.mxu0
        %v634 = vadd.f32 0.0, %v633
        %635 = vmatprep.mubr.f32.mxu0 0.0
        %636 = vmatmul.mubr.f32.gmra.mxu0 %v383
        %v637 = vpop.f32.mrf.mxu0
        %v638 = vadd.f32 0.0, %v637
        %v639 = vpop.f32.mrf.mxu0
        %v640 = vadd.f32 0.0, %v639
        %641 = vdwg.mxu0
        %v642 = vmul.f32 %v452, 0.00390625
        %v643 = vmul.f32 %v454, 0.00390625
        %v644 = vmul.f32 %v458, 0.00390625
        %v645 = vmul.f32 %v460, 0.00390625
        %v646 = vmul.f32 %v464, 0.00390625
        %v647 = vmul.f32 %v466, 0.00390625
        %v648 = vmul.f32 %v470, 0.00390625
        %v649 = vmul.f32 %v472, 0.00390625
        %v650 = vmul.f32 %v476, 0.00390625
        %v651 = vmul.f32 %v478, 0.00390625
        %v652 = vmul.f32 %v482, 0.00390625
        %v653 = vmul.f32 %v484, 0.00390625
        %v654 = vmul.f32 %v488, 0.00390625
        %v655 = vmul.f32 %v490, 0.00390625
        %v656 = vmul.f32 %v494, 0.00390625
        %v657 = vmul.f32 %v496, 0.00390625
        %v658 = vmul.f32 %v500, 0.00390625
        %v659 = vmul.f32 %v502, 0.00390625
        %v660 = vmul.f32 %v506, 0.00390625
        %v661 = vmul.f32 %v508, 0.00390625
        %v662 = vmul.f32 %v512, 0.00390625
        %v663 = vmul.f32 %v514, 0.00390625
        %v664 = vmul.f32 %v518, 0.00390625
        %v665 = vmul.f32 %v520, 0.00390625
        %v666 = vmul.f32 %v524, 0.00390625
        %v667 = vmul.f32 %v526, 0.00390625
        %v668 = vmul.f32 %v530, 0.00390625
        %v669 = vmul.f32 %v532, 0.00390625
        %v670 = vmul.f32 %v536, 0.00390625
        %v671 = vmul.f32 %v538, 0.00390625
        %v672 = vmul.f32 %v542, 0.00390625
        %v673 = vmul.f32 %v544, 0.00390625
        %v674 = vmul.f32 %v548, 0.00390625
        %v675 = vmul.f32 %v550, 0.00390625
        %v676 = vmul.f32 %v554, 0.00390625
        %v677 = vmul.f32 %v556, 0.00390625
        %v678 = vmul.f32 %v560, 0.00390625
        %v679 = vmul.f32 %v562, 0.00390625
        %v680 = vmul.f32 %v566, 0.00390625
        %v681 = vmul.f32 %v568, 0.00390625
        %v682 = vmul.f32 %v572, 0.00390625
        %v683 = vmul.f32 %v574, 0.00390625
        %v684 = vmul.f32 %v578, 0.00390625
        %v685 = vmul.f32 %v580, 0.00390625
        %v686 = vmul.f32 %v584, 0.00390625
        %v687 = vmul.f32 %v586, 0.00390625
        %v688 = vmul.f32 %v590, 0.00390625
        %v689 = vmul.f32 %v592, 0.00390625
        %v690 = vmul.f32 %v596, 0.00390625
        %v691 = vmul.f32 %v598, 0.00390625
        %v692 = vmul.f32 %v602, 0.00390625
        %v693 = vmul.f32 %v604, 0.00390625
        %v694 = vmul.f32 %v608, 0.00390625
        %v695 = vmul.f32 %v610, 0.00390625
        %v696 = vmul.f32 %v614, 0.00390625
        %v697 = vmul.f32 %v616, 0.00390625
        %v698 = vmul.f32 %v620, 0.00390625
        %v699 = vmul.f32 %v622, 0.00390625
        %v700 = vmul.f32 %v626, 0.00390625
        %v701 = vmul.f32 %v628, 0.00390625
        %v702 = vmul.f32 %v632, 0.00390625
        %v703 = vmul.f32 %v634, 0.00390625
        %v704 = vmul.f32 %v638, 0.00390625
        %v705 = vmul.f32 %v640, 0.00390625
        %v706 = vmax.f32 %v642, %v643
        %707 = vmax.xlane.f32.xlu0 %v706
        %v708 = vpop.xlane.xlu0 %707
        %v709 = vmax.f32 %v644, %v645
        %710 = vmax.xlane.f32.xlu0 %v709
        %v711 = vpop.xlane.xlu0 %710
        %v712 = vmax.f32 %v646, %v647
        %713 = vmax.xlane.f32.xlu0 %v712
        %v714 = vpop.xlane.xlu0 %713
        %v715 = vmax.f32 %v648, %v649
        %716 = vmax.xlane.f32.xlu0 %v715
        %v717 = vpop.xlane.xlu0 %716
        %v718 = vmax.f32 %v650, %v651
        %719 = vmax.xlane.f32.xlu0 %v718
        %v720 = vpop.xlane.xlu0 %719
        %v721 = vmax.f32 %v652, %v653
        %722 = vmax.xlane.f32.xlu0 %v721
        %v723 = vpop.xlane.xlu0 %722
        %v724 = vmax.f32 %v654, %v655
        %725 = vmax.xlane.f32.xlu0 %v724
        %v726 = vpop.xlane.xlu0 %725
        %v727 = vmax.f32 %v656, %v657
        %728 = vmax.xlane.f32.xlu0 %v727
        %v729 = vpop.xlane.xlu0 %728
        %v730 = vmax.f32 %v658, %v659
        %731 = vmax.xlane.f32.xlu0 %v730
        %v732 = vpop.xlane.xlu0 %731
        %v733 = vmax.f32 %v660, %v661
        %734 = vmax.xlane.f32.xlu0 %v733
        %v735 = vpop.xlane.xlu0 %734
        %v736 = vmax.f32 %v662, %v663
        %737 = vmax.xlane.f32.xlu0 %v736
        %v738 = vpop.xlane.xlu0 %737
        %v739 = vmax.f32 %v664, %v665
        %740 = vmax.xlane.f32.xlu0 %v739
        %v741 = vpop.xlane.xlu0 %740
        %v742 = vmax.f32 %v666, %v667
        %743 = vmax.xlane.f32.xlu0 %v742
        %v744 = vpop.xlane.xlu0 %743
        %v745 = vmax.f32 %v668, %v669
        %746 = vmax.xlane.f32.xlu0 %v745
        %v747 = vpop.xlane.xlu0 %746
        %v748 = vmax.f32 %v670, %v671
        %749 = vmax.xlane.f32.xlu0 %v748
        %v750 = vpop.xlane.xlu0 %749
        %v751 = vmax.f32 %v672, %v673
        %752 = vmax.xlane.f32.xlu0 %v751
        %v753 = vpop.xlane.xlu0 %752
        %v754 = vmax.f32 %v674, %v675
        %755 = vmax.xlane.f32.xlu0 %v754
        %v756 = vpop.xlane.xlu0 %755
        %v757 = vmax.f32 %v676, %v677
        %758 = vmax.xlane.f32.xlu0 %v757
        %v759 = vpop.xlane.xlu0 %758
        %v760 = vmax.f32 %v678, %v679
        %761 = vmax.xlane.f32.xlu0 %v760
        %v762 = vpop.xlane.xlu0 %761
        %v763 = vmax.f32 %v680, %v681
        %764 = vmax.xlane.f32.xlu0 %v763
        %v765 = vpop.xlane.xlu0 %764
        %v766 = vmax.f32 %v682, %v683
        %767 = vmax.xlane.f32.xlu0 %v766
        %v768 = vpop.xlane.xlu0 %767
        %v769 = vmax.f32 %v684, %v685
        %770 = vmax.xlane.f32.xlu0 %v769
        %v771 = vpop.xlane.xlu0 %770
        %v772 = vmax.f32 %v686, %v687
        %773 = vmax.xlane.f32.xlu0 %v772
        %v774 = vpop.xlane.xlu0 %773
        %v775 = vmax.f32 %v688, %v689
        %776 = vmax.xlane.f32.xlu0 %v775
        %v777 = vpop.xlane.xlu0 %776
        %v778 = vmax.f32 %v690, %v691
        %779 = vmax.xlane.f32.xlu0 %v778
        %v780 = vpop.xlane.xlu0 %779
        %v781 = vmax.f32 %v692, %v693
        %782 = vmax.xlane.f32.xlu0 %v781
        %v783 = vpop.xlane.xlu0 %782
        %v784 = vmax.f32 %v694, %v695
        %785 = vmax.xlane.f32.xlu0 %v784
        %v786 = vpop.xlane.xlu0 %785
        %v787 = vmax.f32 %v696, %v697
        %788 = vmax.xlane.f32.xlu0 %v787
        %v789 = vpop.xlane.xlu0 %788
        %v790 = vmax.f32 %v698, %v699
        %791 = vmax.xlane.f32.xlu0 %v790
        %v792 = vpop.xlane.xlu0 %791
        %v793 = vmax.f32 %v700, %v701
        %794 = vmax.xlane.f32.xlu0 %v793
        %v795 = vpop.xlane.xlu0 %794
        %v796 = vmax.f32 %v702, %v703
        %797 = vmax.xlane.f32.xlu0 %v796
        %v798 = vpop.xlane.xlu0 %797
        %v799 = vmax.f32 %v704, %v705
        %800 = vmax.xlane.f32.xlu0 %v799
        %v801 = vpop.xlane.xlu0 %800
        %v802 = vsub.f32 %v642, %v708
        %v803 = vsub.f32 %v643, %v708
        %v804 = vsub.f32 %v644, %v711
        %v805 = vsub.f32 %v645, %v711
        %v806 = vsub.f32 %v646, %v714
        %v807 = vsub.f32 %v647, %v714
        %v808 = vsub.f32 %v648, %v717
        %v809 = vsub.f32 %v649, %v717
        %v810 = vsub.f32 %v650, %v720
        %v811 = vsub.f32 %v651, %v720
        %v812 = vsub.f32 %v652, %v723
        %v813 = vsub.f32 %v653, %v723
        %v814 = vsub.f32 %v654, %v726
        %v815 = vsub.f32 %v655, %v726
        %v816 = vsub.f32 %v656, %v729
        %v817 = vsub.f32 %v657, %v729
        %v818 = vsub.f32 %v658, %v732
        %v819 = vsub.f32 %v659, %v732
        %v820 = vsub.f32 %v660, %v735
        %v821 = vsub.f32 %v661, %v735
        %v822 = vsub.f32 %v662, %v738
        %v823 = vsub.f32 %v663, %v738
        %v824 = vsub.f32 %v664, %v741
        %v825 = vsub.f32 %v665, %v741
        %v826 = vsub.f32 %v666, %v744
        %v827 = vsub.f32 %v667, %v744
        %v828 = vsub.f32 %v668, %v747
        %v829 = vsub.f32 %v669, %v747
        %v830 = vsub.f32 %v670, %v750
        %v831 = vsub.f32 %v671, %v750
        %v832 = vsub.f32 %v672, %v753
        %v833 = vsub.f32 %v673, %v753
        %v834 = vsub.f32 %v674, %v756
        %v835 = vsub.f32 %v675, %v756
        %v836 = vsub.f32 %v676, %v759
        %v837 = vsub.f32 %v677, %v759
        %v838 = vsub.f32 %v678, %v762
        %v839 = vsub.f32 %v679, %v762
        %v840 = vsub.f32 %v680, %v765
        %v841 = vsub.f32 %v681, %v765
        %v842 = vsub.f32 %v682, %v768
        %v843 = vsub.f32 %v683, %v768
        %v844 = vsub.f32 %v684, %v771
        %v845 = vsub.f32 %v685, %v771
        %v846 = vsub.f32 %v686, %v774
        %v847 = vsub.f32 %v687, %v774
        %v848 = vsub.f32 %v688, %v777
        %v849 = vsub.f32 %v689, %v777
        %v850 = vsub.f32 %v690, %v780
        %v851 = vsub.f32 %v691, %v780
        %v852 = vsub.f32 %v692, %v783
        %v853 = vsub.f32 %v693, %v783
        %v854 = vsub.f32 %v694, %v786
        %v855 = vsub.f32 %v695, %v786
        %v856 = vsub.f32 %v696, %v789
        %v857 = vsub.f32 %v697, %v789
        %v858 = vsub.f32 %v698, %v792
        %v859 = vsub.f32 %v699, %v792
        %v860 = vsub.f32 %v700, %v795
        %v861 = vsub.f32 %v701, %v795
        %v862 = vsub.f32 %v702, %v798
        %v863 = vsub.f32 %v703, %v798
        %v864 = vsub.f32 %v704, %v801
        %v865 = vsub.f32 %v705, %v801
        %v866 = vmul.f32 %v802, 1.442695
        %v867 = vpow.pop %v866
        %v868 = vmul.f32 %v803, 1.442695
        %v869 = vpow.pop %v868
        %v870 = vmul.f32 %v804, 1.442695
        %v871 = vpow.pop %v870
        %v872 = vmul.f32 %v805, 1.442695
        %v873 = vpow.pop %v872
        %v874 = vmul.f32 %v806, 1.442695
        %v875 = vpow.pop %v874
        %v876 = vmul.f32 %v807, 1.442695
        %v877 = vpow.pop %v876
        %v878 = vmul.f32 %v808, 1.442695
        %v879 = vpow.pop %v878
        %v880 = vmul.f32 %v809, 1.442695
        %v881 = vpow.pop %v880
        %v882 = vmul.f32 %v810, 1.442695
        %v883 = vpow.pop %v882
        %v884 = vmul.f32 %v811, 1.442695
        %v885 = vpow.pop %v884
        %v886 = vmul.f32 %v812, 1.442695
        %v887 = vpow.pop %v886
        %v888 = vmul.f32 %v813, 1.442695
        %v889 = vpow.pop %v888
        %v890 = vmul.f32 %v814, 1.442695
        %v891 = vpow.pop %v890
        %v892 = vmul.f32 %v815, 1.442695
        %v893 = vpow.pop %v892
        %v894 = vmul.f32 %v816, 1.442695
        %v895 = vpow.pop %v894
        %v896 = vmul.f32 %v817, 1.442695
        %v897 = vpow.pop %v896
        %v898 = vmul.f32 %v818, 1.442695
        %v899 = vpow.pop %v898
        %v900 = vmul.f32 %v819, 1.442695
        %v901 = vpow.pop %v900
        %v902 = vmul.f32 %v820, 1.442695
        %v903 = vpow.pop %v902
        %v904 = vmul.f32 %v821, 1.442695
        %v905 = vpow.pop %v904
        %v906 = vmul.f32 %v822, 1.442695
        %v907 = vpow.pop %v906
        %v908 = vmul.f32 %v823, 1.442695
        %v909 = vpow.pop %v908
        %v910 = vmul.f32 %v824, 1.442695
        %v911 = vpow.pop %v910
        %v912 = vmul.f32 %v825, 1.442695
        %v913 = vpow.pop %v912
        %v914 = vmul.f32 %v826, 1.442695
        %v915 = vpow.pop %v914
        %v916 = vmul.f32 %v827, 1.442695
        %v917 = vpow.pop %v916
        %v918 = vmul.f32 %v828, 1.442695
        %v919 = vpow.pop %v918
        %v920 = vmul.f32 %v829, 1.442695
        %v921 = vpow.pop %v920
        %v922 = vmul.f32 %v830, 1.442695
        %v923 = vpow.pop %v922
        %v924 = vmul.f32 %v831, 1.442695
        %v925 = vpow.pop %v924
        %v926 = vmul.f32 %v832, 1.442695
        %v927 = vpow.pop %v926
        %v928 = vmul.f32 %v833, 1.442695
        %v929 = vpow.pop %v928
        %v930 = vmul.f32 %v834, 1.442695
        %v931 = vpow.pop %v930
        %v932 = vmul.f32 %v835, 1.442695
        %v933 = vpow.pop %v932
        %v934 = vmul.f32 %v836, 1.442695
        %v935 = vpow.pop %v934
        %v936 = vmul.f32 %v837, 1.442695
        %v937 = vpow.pop %v936
        %v938 = vmul.f32 %v838, 1.442695
        %v939 = vpow.pop %v938
        %v940 = vmul.f32 %v839, 1.442695
        %v941 = vpow.pop %v940
        %v942 = vmul.f32 %v840, 1.442695
        %v943 = vpow.pop %v942
        %v944 = vmul.f32 %v841, 1.442695
        %v945 = vpow.pop %v944
        %v946 = vmul.f32 %v842, 1.442695
        %v947 = vpow.pop %v946
        %v948 = vmul.f32 %v843, 1.442695
        %v949 = vpow.pop %v948
        %v950 = vmul.f32 %v844, 1.442695
        %v951 = vpow.pop %v950
        %v952 = vmul.f32 %v845, 1.442695
        %v953 = vpow.pop %v952
        %v954 = vmul.f32 %v846, 1.442695
        %v955 = vpow.pop %v954
        %v956 = vmul.f32 %v847, 1.442695
        %v957 = vpow.pop %v956
        %v958 = vmul.f32 %v848, 1.442695
        %v959 = vpow.pop %v958
        %v960 = vmul.f32 %v849, 1.442695
        %v961 = vpow.pop %v960
        %v962 = vmul.f32 %v850, 1.442695
        %v963 = vpow.pop %v962
        %v964 = vmul.f32 %v851, 1.442695
        %v965 = vpow.pop %v964
        %v966 = vmul.f32 %v852, 1.442695
        %v967 = vpow.pop %v966
        %v968 = vmul.f32 %v853, 1.442695
        %v969 = vpow.pop %v968
        %v970 = vmul.f32 %v854, 1.442695
        %v971 = vpow.pop %v970
        %v972 = vmul.f32 %v855, 1.442695
        %v973 = vpow.pop %v972
        %v974 = vmul.f32 %v856, 1.442695
        %v975 = vpow.pop %v974
        %v976 = vmul.f32 %v857, 1.442695
        %v977 = vpow.pop %v976
        %v978 = vmul.f32 %v858, 1.442695
        %v979 = vpow.pop %v978
        %v980 = vmul.f32 %v859, 1.442695
        %v981 = vpow.pop %v980
        %v982 = vmul.f32 %v860, 1.442695
        %v983 = vpow.pop %v982
        %v984 = vmul.f32 %v861, 1.442695
        %v985 = vpow.pop %v984
        %v986 = vmul.f32 %v862, 1.442695
        %v987 = vpow.pop %v986
        %v988 = vmul.f32 %v863, 1.442695
        %v989 = vpow.pop %v988
        %v990 = vmul.f32 %v864, 1.442695
        %v991 = vpow.pop %v990
        %v992 = vmul.f32 %v865, 1.442695
        %v993 = vpow.pop %v992
        %v994 = vadd.f32 %v867, %v869
        %995 = vadd.xlane.f32.xlu0 %v994
        %v996 = vpop.xlane.xlu0 %995
        %v997 = vadd.f32 %v871, %v873
        %998 = vadd.xlane.f32.xlu0 %v997
        %v999 = vpop.xlane.xlu0 %998
        %v1000 = vadd.f32 %v875, %v877
        %1001 = vadd.xlane.f32.xlu0 %v1000
        %v1002 = vpop.xlane.xlu0 %1001
        %v1003 = vadd.f32 %v879, %v881
        %1004 = vadd.xlane.f32.xlu0 %v1003
        %v1005 = vpop.xlane.xlu0 %1004
        %v1006 = vadd.f32 %v883, %v885
        %1007 = vadd.xlane.f32.xlu0 %v1006
        %v1008 = vpop.xlane.xlu0 %1007
        %v1009 = vadd.f32 %v887, %v889
        %1010 = vadd.xlane.f32.xlu0 %v1009
        %v1011 = vpop.xlane.xlu0 %1010
        %v1012 = vadd.f32 %v891, %v893
        %1013 = vadd.xlane.f32.xlu0 %v1012
        %v1014 = vpop.xlane.xlu0 %1013
        %v1015 = vadd.f32 %v895, %v897
        %1016 = vadd.xlane.f32.xlu0 %v1015
        %v1017 = vpop.xlane.xlu0 %1016
        %v1018 = vadd.f32 %v899, %v901
        %1019 = vadd.xlane.f32.xlu0 %v1018
        %v1020 = vpop.xlane.xlu0 %1019
        %v1021 = vadd.f32 %v903, %v905
        %1022 = vadd.xlane.f32.xlu0 %v1021
        %v1023 = vpop.xlane.xlu0 %1022
        %v1024 = vadd.f32 %v907, %v909
        %1025 = vadd.xlane.f32.xlu0 %v1024
        %v1026 = vpop.xlane.xlu0 %1025
        %v1027 = vadd.f32 %v911, %v913
        %1028 = vadd.xlane.f32.xlu0 %v1027
        %v1029 = vpop.xlane.xlu0 %1028
        %v1030 = vadd.f32 %v915, %v917
        %1031 = vadd.xlane.f32.xlu0 %v1030
        %v1032 = vpop.xlane.xlu0 %1031
        %v1033 = vadd.f32 %v919, %v921
        %1034 = vadd.xlane.f32.xlu0 %v1033
        %v1035 = vpop.xlane.xlu0 %1034
        %v1036 = vadd.f32 %v923, %v925
        %1037 = vadd.xlane.f32.xlu0 %v1036
        %v1038 = vpop.xlane.xlu0 %1037
        %v1039 = vadd.f32 %v927, %v929
        %1040 = vadd.xlane.f32.xlu0 %v1039
        %v1041 = vpop.xlane.xlu0 %1040
        %v1042 = vadd.f32 %v931, %v933
        %1043 = vadd.xlane.f32.xlu0 %v1042
        %v1044 = vpop.xlane.xlu0 %1043
        %v1045 = vadd.f32 %v935, %v937
        %1046 = vadd.xlane.f32.xlu0 %v1045
        %v1047 = vpop.xlane.xlu0 %1046
        %v1048 = vadd.f32 %v939, %v941
        %1049 = vadd.xlane.f32.xlu0 %v1048
        %v1050 = vpop.xlane.xlu0 %1049
        %v1051 = vadd.f32 %v943, %v945
        %1052 = vadd.xlane.f32.xlu0 %v1051
        %v1053 = vpop.xlane.xlu0 %1052
        %v1054 = vadd.f32 %v947, %v949
        %1055 = vadd.xlane.f32.xlu0 %v1054
        %v1056 = vpop.xlane.xlu0 %1055
        %v1057 = vadd.f32 %v951, %v953
        %1058 = vadd.xlane.f32.xlu0 %v1057
        %v1059 = vpop.xlane.xlu0 %1058
        %v1060 = vadd.f32 %v955, %v957
        %1061 = vadd.xlane.f32.xlu0 %v1060
        %v1062 = vpop.xlane.xlu0 %1061
        %v1063 = vadd.f32 %v959, %v961
        %1064 = vadd.xlane.f32.xlu0 %v1063
        %v1065 = vpop.xlane.xlu0 %1064
        %v1066 = vadd.f32 %v963, %v965
        %1067 = vadd.xlane.f32.xlu0 %v1066
        %v1068 = vpop.xlane.xlu0 %1067
        %v1069 = vadd.f32 %v967, %v969
        %1070 = vadd.xlane.f32.xlu0 %v1069
        %v1071 = vpop.xlane.xlu0 %1070
        %v1072 = vadd.f32 %v971, %v973
        %1073 = vadd.xlane.f32.xlu0 %v1072
        %v1074 = vpop.xlane.xlu0 %1073
        %v1075 = vadd.f32 %v975, %v977
        %1076 = vadd.xlane.f32.xlu0 %v1075
        %v1077 = vpop.xlane.xlu0 %1076
        %v1078 = vadd.f32 %v979, %v981
        %1079 = vadd.xlane.f32.xlu0 %v1078
        %v1080 = vpop.xlane.xlu0 %1079
        %v1081 = vadd.f32 %v983, %v985
        %1082 = vadd.xlane.f32.xlu0 %v1081
        %v1083 = vpop.xlane.xlu0 %1082
        %v1084 = vadd.f32 %v987, %v989
        %1085 = vadd.xlane.f32.xlu0 %v1084
        %v1086 = vpop.xlane.xlu0 %1085
        %v1087 = vadd.f32 %v991, %v993
        %1088 = vadd.xlane.f32.xlu0 %v1087
        %v1089 = vpop.xlane.xlu0 %1088
        %v1090 = vrcp.pop %v996
        %v1091 = vmul.f32 %v867, %v1090
        %v1092 = vmul.f32 %v869, %v1090
        %v1093 = vrcp.pop %v999
        %v1094 = vmul.f32 %v871, %v1093
        %v1095 = vmul.f32 %v873, %v1093
        %v1096 = vrcp.pop %v1002
        %v1097 = vmul.f32 %v875, %v1096
        %v1098 = vmul.f32 %v877, %v1096
        %v1099 = vrcp.pop %v1005
        %v1100 = vmul.f32 %v879, %v1099
        %v1101 = vmul.f32 %v881, %v1099
        %v1102 = vrcp.pop %v1008
        %v1103 = vmul.f32 %v883, %v1102
        %v1104 = vmul.f32 %v885, %v1102
        %v1105 = vrcp.pop %v1011
        %v1106 = vmul.f32 %v887, %v1105
        %v1107 = vmul.f32 %v889, %v1105
        %v1108 = vrcp.pop %v1014
        %v1109 = vmul.f32 %v891, %v1108
        %v1110 = vmul.f32 %v893, %v1108
        %v1111 = vrcp.pop %v1017
        %v1112 = vmul.f32 %v895, %v1111
        %v1113 = vmul.f32 %v897, %v1111
        %v1114 = vrcp.pop %v1020
        %v1115 = vmul.f32 %v899, %v1114
        %v1116 = vmul.f32 %v901, %v1114
        %v1117 = vrcp.pop %v1023
        %v1118 = vmul.f32 %v903, %v1117
        %v1119 = vmul.f32 %v905, %v1117
        %v1120 = vrcp.pop %v1026
        %v1121 = vmul.f32 %v907, %v1120
        %v1122 = vmul.f32 %v909, %v1120
        %v1123 = vrcp.pop %v1029
        %v1124 = vmul.f32 %v911, %v1123
        %v1125 = vmul.f32 %v913, %v1123
        %v1126 = vrcp.pop %v1032
        %v1127 = vmul.f32 %v915, %v1126
        %v1128 = vmul.f32 %v917, %v1126
        %v1129 = vrcp.pop %v1035
        %v1130 = vmul.f32 %v919, %v1129
        %v1131 = vmul.f32 %v921, %v1129
        %v1132 = vrcp.pop %v1038
        %v1133 = vmul.f32 %v923, %v1132
        %v1134 = vmul.f32 %v925, %v1132
        %v1135 = vrcp.pop %v1041
        %v1136 = vmul.f32 %v927, %v1135
        %v1137 = vmul.f32 %v929, %v1135
        %v1138 = vrcp.pop %v1044
        %v1139 = vmul.f32 %v931, %v1138
        %v1140 = vmul.f32 %v933, %v1138
        %v1141 = vrcp.pop %v1047
        %v1142 = vmul.f32 %v935, %v1141
        %v1143 = vmul.f32 %v937, %v1141
        %v1144 = vrcp.pop %v1050
        %v1145 = vmul.f32 %v939, %v1144
        %v1146 = vmul.f32 %v941, %v1144
        %v1147 = vrcp.pop %v1053
        %v1148 = vmul.f32 %v943, %v1147
        %v1149 = vmul.f32 %v945, %v1147
        %v1150 = vrcp.pop %v1056
        %v1151 = vmul.f32 %v947, %v1150
        %v1152 = vmul.f32 %v949, %v1150
        %v1153 = vrcp.pop %v1059
        %v1154 = vmul.f32 %v951, %v1153
        %v1155 = vmul.f32 %v953, %v1153
        %v1156 = vrcp.pop %v1062
        %v1157 = vmul.f32 %v955, %v1156
        %v1158 = vmul.f32 %v957, %v1156
        %v1159 = vrcp.pop %v1065
        %v1160 = vmul.f32 %v959, %v1159
        %v1161 = vmul.f32 %v961, %v1159
        %v1162 = vrcp.pop %v1068
        %v1163 = vmul.f32 %v963, %v1162
        %v1164 = vmul.f32 %v965, %v1162
        %v1165 = vrcp.pop %v1071
        %v1166 = vmul.f32 %v967, %v1165
        %v1167 = vmul.f32 %v969, %v1165
        %v1168 = vrcp.pop %v1074
        %v1169 = vmul.f32 %v971, %v1168
        %v1170 = vmul.f32 %v973, %v1168
        %v1171 = vrcp.pop %v1077
        %v1172 = vmul.f32 %v975, %v1171
        %v1173 = vmul.f32 %v977, %v1171
        %v1174 = vrcp.pop %v1080
        %v1175 = vmul.f32 %v979, %v1174
        %v1176 = vmul.f32 %v981, %v1174
        %v1177 = vrcp.pop %v1083
        %v1178 = vmul.f32 %v983, %v1177
        %v1179 = vmul.f32 %v985, %v1177
        %v1180 = vrcp.pop %v1086
        %v1181 = vmul.f32 %v987, %v1180
        %v1182 = vmul.f32 %v989, %v1180
        %v1183 = vrcp.pop %v1089
        %v1184 = vmul.f32 %v991, %v1183
        %v1185 = vmul.f32 %v993, %v1183
        %v1186 = vld [vmem:[%s1] sm:$0xff]
        %v1187 = vld [vmem:[%s1 + $0x8] sm:$0xff]
        %v1189 = vsel %vm288, %v1186, 0
        %v1192 = vsel %vm288, %v1187, 0
        %1194 = vmatprep.subr.mxu0 0.0
        %1195 = vmatpush1.msra.mxu0 0.0
        %1196 = vmatprep.subr.mxu0 0.0
        %1197 = vmatpush1.msra.mxu0 0.0
        %1198 = vmatprep.subr.mxu0 0.0
        %1199 = vmatpush1.msra.mxu0 0.0
        %1200 = vmatprep.subr.mxu0 0.0
        %1201 = vmatpush1.msra.mxu0 0.0
        %1202 = vmatprep.subr.mxu0 0.0
        %1203 = vmatpush1.msra.mxu0 0.0
        %1204 = vmatprep.subr.mxu0 0.0
        %1205 = vmatpush1.msra.mxu0 0.0
        %1206 = vmatprep.subr.mxu0 0.0
        %1207 = vmatpush1.msra.mxu0 0.0
        %1208 = vmatprep.subr.mxu0 0.0
        %1209 = vmatpush1.msra.mxu0 0.0
        %1210 = vmatprep.subr.mxu0 0.0
        %1211 = vmatpush1.msra.mxu0 0.0
        %1212 = vmatprep.subr.mxu0 0.0
        %1213 = vmatpush1.msra.mxu0 0.0
        %1214 = vmatprep.subr.mxu0 0.0
        %1215 = vmatpush1.msra.mxu0 0.0
        %1216 = vmatprep.subr.mxu0 0.0
        %1217 = vmatpush1.msra.mxu0 0.0
        %1218 = vmatprep.subr.mxu0 %v223
        %1219 = vmatpush1.msra.mxu0 %v222
        %1220 = vmatprep.subr.mxu0 %v221
        %1221 = vmatpush1.msra.mxu0 %v220
        %1222 = vmatprep.subr.mxu0 %v219
        %1223 = vmatpush1.msra.mxu0 %v218
        %1224 = vmatprep.subr.mxu0 %v217
        %1225 = vmatpush1.msra.mxu0 %v216
        %1226 = vmatprep.subr.mxu0 0.0
        %1227 = vmatpush2.msra.mxu0 0.0
        %1228 = vmatprep.subr.mxu0 0.0
        %1229 = vmatpush2.msra.mxu0 0.0
        %1230 = vmatprep.subr.mxu0 0.0
        %1231 = vmatpush2.msra.mxu0 0.0
        %1232 = vmatprep.subr.mxu0 0.0
        %1233 = vmatpush2.msra.mxu0 0.0
        %1234 = vmatprep.subr.mxu0 0.0
        %1235 = vmatpush2.msra.mxu0 0.0
        %1236 = vmatprep.subr.mxu0 0.0
        %1237 = vmatpush2.msra.mxu0 0.0
        %1238 = vmatprep.subr.mxu0 0.0
        %1239 = vmatpush2.msra.mxu0 0.0
        %1240 = vmatprep.subr.mxu0 0.0
        %1241 = vmatpush2.msra.mxu0 0.0
        %1242 = vmatprep.subr.mxu0 0.0
        %1243 = vmatpush2.msra.mxu0 0.0
        %1244 = vmatprep.subr.mxu0 0.0
        %1245 = vmatpush2.msra.mxu0 0.0
        %1246 = vmatprep.subr.mxu0 0.0
        %1247 = vmatpush2.msra.mxu0 0.0
        %1248 = vmatprep.subr.mxu0 0.0
        %1249 = vmatpush2.msra.mxu0 0.0
        %1250 = vmatprep.subr.mxu0 0.0
        %1251 = vmatpush2.msra.mxu0 0.0
        %1252 = vmatprep.subr.mxu0 0.0
        %1253 = vmatpush2.msra.mxu0 0.0
        %1254 = vmatprep.subr.mxu0 0.0
        %1255 = vmatpush2.msra.mxu0 0.0
        %1256 = vmatprep.subr.mxu0 0.0
        %1257 = vmatpush2.msra.mxu0 0.0
        %1258 = vmatprep.mubr.f32.mxu0 0.0
        %1259 = vmatmul.mubr.f32.gmra.mxu0 %v1189
        %v1260 = vpop.f32.mrf.mxu0
        %v1261 = vadd.f32 0.0, %v1260
        %v1262 = vpop.f32.mrf.mxu0
        %v1263 = vadd.f32 0.0, %v1262
        %1264 = vmatprep.mubr.f32.mxu0 0.0
        %1265 = vmatmul.mubr.f32.gmra.mxu0 %v1192
        %v1266 = vpop.f32.mrf.mxu0
        %v1267 = vadd.f32 0.0, %v1266
        %v1268 = vpop.f32.mrf.mxu0
        %v1269 = vadd.f32 0.0, %v1268
        %1270 = vdwg.mxu0
        %1271 = vmatprep.subr.mxu0 %v1137
        %1272 = vmatpush1.xpose.msra.mxu0 %v1136
        %1273 = vmatprep.subr.mxu0 %v1134
        %1274 = vmatpush1.xpose.msra.mxu0 %v1133
        %1275 = vmatprep.subr.mxu0 %v1131
        %1276 = vmatpush1.xpose.msra.mxu0 %v1130
        %1277 = vmatprep.subr.mxu0 %v1128
        %1278 = vmatpush1.xpose.msra.mxu0 %v1127
        %1279 = vmatprep.subr.mxu0 %v1125
        %1280 = vmatpush1.xpose.msra.mxu0 %v1124
        %1281 = vmatprep.subr.mxu0 %v1122
        %1282 = vmatpush1.xpose.msra.mxu0 %v1121
        %1283 = vmatprep.subr.mxu0 %v1119
        %1284 = vmatpush1.xpose.msra.mxu0 %v1118
        %1285 = vmatprep.subr.mxu0 %v1116
        %1286 = vmatpush1.xpose.msra.mxu0 %v1115
        %1287 = vmatprep.subr.mxu0 %v1113
        %1288 = vmatpush1.xpose.msra.mxu0 %v1112
        %1289 = vmatprep.subr.mxu0 %v1110
        %1290 = vmatpush1.xpose.msra.mxu0 %v1109
        %1291 = vmatprep.subr.mxu0 %v1107
        %1292 = vmatpush1.xpose.msra.mxu0 %v1106
        %1293 = vmatprep.subr.mxu0 %v1104
        %1294 = vmatpush1.xpose.msra.mxu0 %v1103
        %1295 = vmatprep.subr.mxu0 %v1101
        %1296 = vmatpush1.xpose.msra.mxu0 %v1100
        %1297 = vmatprep.subr.mxu0 %v1098
        %1298 = vmatpush1.xpose.msra.mxu0 %v1097
        %1299 = vmatprep.subr.mxu0 %v1095
        %1300 = vmatpush1.xpose.msra.mxu0 %v1094
        %1301 = vmatprep.subr.mxu0 %v1092
        %1302 = vmatpush1.xpose.msra.mxu0 %v1091
        %1303 = vmatprep.subr.mxu0 %v1185
        %1304 = vmatpush2.xpose.msra.mxu0 %v1184
        %1305 = vmatprep.subr.mxu0 %v1182
        %1306 = vmatpush2.xpose.msra.mxu0 %v1181
        %1307 = vmatprep.subr.mxu0 %v1179
        %1308 = vmatpush2.xpose.msra.mxu0 %v1178
        %1309 = vmatprep.subr.mxu0 %v1176
        %1310 = vmatpush2.xpose.msra.mxu0 %v1175
        %1311 = vmatprep.subr.mxu0 %v1173
        %1312 = vmatpush2.xpose.msra.mxu0 %v1172
        %1313 = vmatprep.subr.mxu0 %v1170
        %1314 = vmatpush2.xpose.msra.mxu0 %v1169
        %1315 = vmatprep.subr.mxu0 %v1167
        %1316 = vmatpush2.xpose.msra.mxu0 %v1166
        %1317 = vmatprep.subr.mxu0 %v1164
        %1318 = vmatpush2.xpose.msra.mxu0 %v1163
        %1319 = vmatprep.subr.mxu0 %v1161
        %1320 = vmatpush2.xpose.msra.mxu0 %v1160
        %1321 = vmatprep.subr.mxu0 %v1158
        %1322 = vmatpush2.xpose.msra.mxu0 %v1157
        %1323 = vmatprep.subr.mxu0 %v1155
        %1324 = vmatpush2.xpose.msra.mxu0 %v1154
        %1325 = vmatprep.subr.mxu0 %v1152
        %1326 = vmatpush2.xpose.msra.mxu0 %v1151
        %1327 = vmatprep.subr.mxu0 %v1149
        %1328 = vmatpush2.xpose.msra.mxu0 %v1148
        %1329 = vmatprep.subr.mxu0 %v1146
        %1330 = vmatpush2.xpose.msra.mxu0 %v1145
        %1331 = vmatprep.subr.mxu0 %v1143
        %1332 = vmatpush2.xpose.msra.mxu0 %v1142
        %1333 = vmatprep.subr.mxu0 %v1140
        %1334 = vmatpush2.xpose.msra.mxu0 %v1139
        %1335 = vmatprep.mubr.f32.mxu0 %v1263
        %1336 = vmatmul.mubr.f32.gmra.mxu0 %v1261
        %v1337 = vpop.f32.mrf.mxu0
        %v1338 = vadd.f32 0.0, %v1337
        %v1339 = vpop.f32.mrf.mxu0
        %v1340 = vadd.f32 0.0, %v1339
        %1341 = vmatprep.mubr.f32.mxu0 %v1269
        %1342 = vmatmul.mubr.f32.gmra.mxu0 %v1267
        %v1343 = vpop.f32.mrf.mxu0
        %v1344 = vadd.f32 0.0, %v1343
        %v1345 = vpop.f32.mrf.mxu0
        %v1346 = vadd.f32 0.0, %v1345
        %1347 = vdwg.mxu0
        %v1348 = vld [vmem:[%s2] sm:$0xff]
        %v1349 = vld [vmem:[%s2 + $0x8] sm:$0xff]
        %v1350 = vld [vmem:[%s2 + $0x10] sm:$0xff]
        %v1351 = vld [vmem:[%s2 + $0x18] sm:$0xff]
        %v1352 = vld [vmem:[%s3] sm:$0xff]
        %v1353 = vld [vmem:[%s3 + $0x8] sm:$0xff]
        %v1354 = vld [vmem:[%s3 + $0x10] sm:$0xff]
        %v1355 = vld [vmem:[%s3 + $0x18] sm:$0xff]
        %1357 = vset.pattern.permute.xlu0 0
        %1358 = vperm.xlu0 %1357, %v1352
        %v1359 = vpop.permute.xlu0 %1358
        %1362 = vset.pattern.permute.xlu0 0
        %1363 = vperm.xlu0 %1362, %v1353
        %v1364 = vpop.permute.xlu0 %1363
        %1367 = vset.pattern.permute.xlu0 0
        %1368 = vperm.xlu0 %1367, %v1354
        %v1369 = vpop.permute.xlu0 %1368
        %1372 = vset.pattern.permute.xlu0 0
        %1373 = vperm.xlu0 %1372, %v1355
        %v1374 = vpop.permute.xlu0 %1373
        %vm1376 = vcmask 130048
        %v1378 = vsel %vm1376, %v1348, 0
        %v1381 = vsel %vm1376, %v1349, 0
        %v1384 = vsel %vm1376, %v1350, 0
        %v1387 = vsel %vm1376, %v1351, 0
        %1389 = vmatprep.subr.mxu0 0.0
        %1390 = vmatpush1.msra.mxu0 0.0
        %1391 = vmatprep.subr.mxu0 0.0
        %1392 = vmatpush1.msra.mxu0 0.0
        %1393 = vmatprep.subr.mxu0 0.0
        %1394 = vmatpush1.msra.mxu0 0.0
        %1395 = vmatprep.subr.mxu0 0.0
        %1396 = vmatpush1.msra.mxu0 0.0
        %1397 = vmatprep.subr.mxu0 0.0
        %1398 = vmatpush1.msra.mxu0 0.0
        %1399 = vmatprep.subr.mxu0 0.0
        %1400 = vmatpush1.msra.mxu0 0.0
        %1401 = vmatprep.subr.mxu0 0.0
        %1402 = vmatpush1.msra.mxu0 0.0
        %1403 = vmatprep.subr.mxu0 0.0
        %1404 = vmatpush1.msra.mxu0 0.0
        %1405 = vmatprep.subr.mxu0 0.0
        %1406 = vmatpush1.msra.mxu0 0.0
        %1407 = vmatprep.subr.mxu0 0.0
        %1408 = vmatpush1.msra.mxu0 0.0
        %1409 = vmatprep.subr.mxu0 0.0
        %1410 = vmatpush1.msra.mxu0 0.0
        %1411 = vmatprep.subr.mxu0 0.0
        %1412 = vmatpush1.msra.mxu0 0.0
        %1413 = vmatprep.subr.mxu0 0.0
        %1414 = vmatpush1.msra.mxu0 0.0
        %1415 = vmatprep.subr.mxu0 0.0
        %1416 = vmatpush1.msra.mxu0 0.0
        %1417 = vmatprep.subr.mxu0 %v1346
        %1418 = vmatpush1.msra.mxu0 %v1344
        %1419 = vmatprep.subr.mxu0 %v1340
        %1420 = vmatpush1.msra.mxu0 %v1338
        %1421 = vmatprep.subr.mxu0 0.0
        %1422 = vmatpush2.msra.mxu0 0.0
        %1423 = vmatprep.subr.mxu0 0.0
        %1424 = vmatpush2.msra.mxu0 0.0
        %1425 = vmatprep.subr.mxu0 0.0
        %1426 = vmatpush2.msra.mxu0 0.0
        %1427 = vmatprep.subr.mxu0 0.0
        %1428 = vmatpush2.msra.mxu0 0.0
        %1429 = vmatprep.subr.mxu0 0.0
        %1430 = vmatpush2.msra.mxu0 0.0
        %1431 = vmatprep.subr.mxu0 0.0
        %1432 = vmatpush2.msra.mxu0 0.0
        %1433 = vmatprep.subr.mxu0 0.0
        %1434 = vmatpush2.msra.mxu0 0.0
        %1435 = vmatprep.subr.mxu0 0.0
        %1436 = vmatpush2.msra.mxu0 0.0
        %1437 = vmatprep.subr.mxu0 0.0
        %1438 = vmatpush2.msra.mxu0 0.0
        %1439 = vmatprep.subr.mxu0 0.0
        %1440 = vmatpush2.msra.mxu0 0.0
        %1441 = vmatprep.subr.mxu0 0.0
        %1442 = vmatpush2.msra.mxu0 0.0
        %1443 = vmatprep.subr.mxu0 0.0
        %1444 = vmatpush2.msra.mxu0 0.0
        %1445 = vmatprep.subr.mxu0 0.0
        %1446 = vmatpush2.msra.mxu0 0.0
        %1447 = vmatprep.subr.mxu0 0.0
        %1448 = vmatpush2.msra.mxu0 0.0
        %1449 = vmatprep.subr.mxu0 0.0
        %1450 = vmatpush2.msra.mxu0 0.0
        %1451 = vmatprep.subr.mxu0 0.0
        %1452 = vmatpush2.msra.mxu0 0.0
        %1453 = vmatprep.mubr.f32.mxu0 0.0
        %1454 = vmatmul.mubr.f32.gmra.mxu0 %v1378
        %v1455 = vpop.f32.mrf.mxu0
        %v1456 = vadd.f32 %v1359, %v1455
        %v1457 = vpop.f32.mrf.mxu0
        %v1458 = vadd.f32 %v1359, %v1457
        %1459 = vmatprep.mubr.f32.mxu0 0.0
        %1460 = vmatmul.mubr.f32.gmra.mxu0 %v1381
        %v1461 = vpop.f32.mrf.mxu0
        %v1462 = vadd.f32 %v1364, %v1461
        %v1463 = vpop.f32.mrf.mxu0
        %v1464 = vadd.f32 %v1364, %v1463
        %1465 = vmatprep.mubr.f32.mxu0 0.0
        %1466 = vmatmul.mubr.f32.gmra.mxu0 %v1384
        %v1467 = vpop.f32.mrf.mxu0
        %v1468 = vadd.f32 %v1369, %v1467
        %v1469 = vpop.f32.mrf.mxu0
        %v1470 = vadd.f32 %v1369, %v1469
        %1471 = vmatprep.mubr.f32.mxu0 0.0
        %1472 = vmatmul.mubr.f32.gmra.mxu0 %v1387
        %v1473 = vpop.f32.mrf.mxu0
        %v1474 = vadd.f32 %v1374, %v1473
        %v1475 = vpop.f32.mrf.mxu0
        %v1476 = vadd.f32 %v1374, %v1475
        %1477 = vdwg.mxu0
        %v1478 = vadd.f32 %v1456, %v216
        %v1479 = vadd.f32 %v1458, %v217
        %v1480 = vadd.f32 %v1462, %v218
        %v1481 = vadd.f32 %v1464, %v219
        %v1482 = vadd.f32 %v1468, %v220
        %v1483 = vadd.f32 %v1470, %v221
        %v1484 = vadd.f32 %v1474, %v222
        %v1485 = vadd.f32 %v1476, %v223
        %1486 = vst [vmem:[%s215] sm:$0xff] %v1478
        %1487 = vst [vmem:[%s215 + $0x8] sm:$0xff] %v1479
        %1488 = vst [vmem:[%s215 + $0x10] sm:$0xff] %v1480
        %1489 = vst [vmem:[%s215 + $0x18] sm:$0xff] %v1481
        %1490 = vst [vmem:[%s215 + $0x20] sm:$0xff] %v1482
        %1491 = vst [vmem:[%s215 + $0x28] sm:$0xff] %v1483
        %1492 = vst [vmem:[%s215 + $0x30] sm:$0xff] %v1484
        %1493 = vst [vmem:[%s215 + $0x38] sm:$0xff] %v1485
        %s1494 = sand.u32 %s118, 1
        %s1495 = scalar_lea.sflag [#allocation4], %s1494
        %s1496 = sand.u32 %s118, 1
        %s1497 = smul.addr %s1496, 64
        %s1498 = scalar_lea.vmem [#allocation5], %s1497
        // Predicated region
        $region41: #{tpu_custom_call.1} parent=35 // pred_check
          %p1499 = pneg %p128
        $region42: #{tpu_custom_call.1} parent=35 // pred_check_branch
          %1501 = sbr.rel (%p1499) target = $region44
        $region43: #{tpu_custom_call.1} parent=35 // pred_region
          %s1503 = ssub.s32 1024, 1024
          %1504 = vsyncadd %s1495, %s1503
          %s1505 = smul.addr %s21, 8
          %s1506 = smul.addr %s1505, 128
          %s1507 = scalar_lea.hbm %s4, %s1506
          %s1508 = sshll.u32 %s1498, 4
          %s1509 = int_to_ptr.vmem [resolvable:$true] %s1508
          %1514 = dma.vmem_to_hbm [thread:$0]  %s1509, 1024, %s1507, %s1495, 256, 256, 16
        $region44: #{tpu_custom_call.1} parent=35 // pred_fallthru
          _
      $region36: #{tpu_custom_call.1} parent=5 // pred_fallthru
        _
      %p1515 = scmp.le.s32.totalorder 2, %s16
      // Predicated region
      $region45: #{tpu_custom_call.1} parent=5 // pred_check
        %p1516 = pneg %p1515
      $region46: #{tpu_custom_call.1} parent=5 // pred_check_branch
        %1518 = sbr.rel (%p1516) target = $region48
      $region47: #{tpu_custom_call.1} parent=5 // pred_region
        %s1519 = ssub.s32 %s16, 2
        // Predicated region
        $region49: #{tpu_custom_call.1} parent=47 // pred_check
          %p1520 = pneg %p134
        $region50: #{tpu_custom_call.1} parent=47 // pred_check_branch
          %1522 = sbr.rel (%p1520) target = $region52
        $region51: #{tpu_custom_call.1} parent=47 // pred_region
          %s1523 = sand.u32 %s119, 1
          %s1524 = scalar_lea.sflag [#allocation4], %s1523
          %s1525 = sand.u32 %s119, 1
          %s1526 = smul.addr %s1525, 64
          %s1527 = scalar_lea.vmem [#allocation5], %s1526
          %1528 = dma.done %s1524, 1024
        $region52: #{tpu_custom_call.1} parent=47 // pred_fallthru
          _
      $region48: #{tpu_custom_call.1} parent=5 // pred_fallthru
        _
    $region6: #{tpu_custom_call.1} parent=1 // loop_footer
      %s20 = sadd.s32 1, %s16
    $region7: #{tpu_custom_call.1} parent=1 // loop_footer_branch
      %15 = sbr.rel target = $region3
    $region8: #{tpu_custom_call.1} parent=1 // loop_exit
      _
    %1529 = vsyncpa [#allocation3], 1
    %s1530 = scalar_lea.sflag [#allocation3], 1
    %1531 = vsyncpa %s1530, 1
    %1532 = vsyncpa [#allocation4], 1
    %s1533 = scalar_lea.sflag [#allocation4], 1
    %1534 = vsyncpa %s1533, 1

</llo_original>
